<compile_context>
chip_gen: v5e
topology: v5e:2x2
jax: 0.10.0
libtpu: 0.0.40
codegen_flags: <defaults>
</compile_context>

<pallas_src>
import jax
import jax.numpy as jnp
from jax.experimental import pallas as pl
from jax.experimental.pallas import tpu as pltpu


_LANE = 128


def _round_up(a, m):
    return ((a + m - 1) // m) * m


def _leaky_relu(v, slope=0.2):
    return jnp.where(v > 0, v, slope * v)


def encoder_block_kernel(
    xt_ref,                    # (n_genes, TB)  f32, features on sublanes, batch on lanes
    w0_ref, b0_ref,            # (t1, n_genes) bf16, (t1, 1) f32
    w1_ref, b1_ref,            # (t2, t1)      bf16 == W1 @ adj1, (t2, 1) f32
    w2_ref, b2_ref,            # (t3, t2)      bf16 == W2 @ adj2, (t3, 1) f32
    w3_ref, b3_ref,            # (hid, t3)     bf16 == W3 @ adj3, (hid, 1) f32
    out_ref,                   # (hid, TB)     bf16 (or f32 if requested)
):
    # In-kernel cast of the streamed activations (no separate XLA cast pass over HBM).
    x = xt_ref[...].astype(jnp.bfloat16)
    # enc_layer0 (Dropout == identity at eval)
    h = jnp.dot(w0_ref[...], x, preferred_element_type=jnp.float32)
    h = _leaky_relu(h + b0_ref[...])
    # enc_layer1, adjacency pre-folded into the weight
    h = jnp.dot(w1_ref[...], h.astype(jnp.bfloat16), preferred_element_type=jnp.float32)
    h = _leaky_relu(h + b1_ref[...])
    # enc_layer2
    h = jnp.dot(w2_ref[...], h.astype(jnp.bfloat16), preferred_element_type=jnp.float32)
    h = _leaky_relu(h + b2_ref[...])
    # enc_layer3
    h = jnp.dot(w3_ref[...], h.astype(jnp.bfloat16), preferred_element_type=jnp.float32)
    out_ref[...] = _leaky_relu(h + b3_ref[...]).astype(out_ref.dtype)


def prepare_encoder_params(params, adj1, adj2, adj3, *, matmul_dtype=jnp.bfloat16):
    """One-time parameter preparation (call once, outside the hot path).

    params: PyTorch layout, wK (out, in), bK (out,).
    Folds each adjacency into the following Linear and casts weights to bf16.
    """
    a1 = adj1.astype(jnp.float32)
    a2 = adj2.astype(jnp.float32)
    a3 = adj3.astype(jnp.float32)
    w0 = params["w0"]
    w1f = params["w1"] @ a1          # (t2, t1)   == (adj1.T @ W1.T).T
    w2f = params["w2"] @ a2          # (t3, t2)
    w3f = params["w3"] @ a3          # (hid, t3)
    return (
        w0.astype(matmul_dtype),  params["b0"].astype(jnp.float32)[:, None],
        w1f.astype(matmul_dtype), params["b1"].astype(jnp.float32)[:, None],
        w2f.astype(matmul_dtype), params["b2"].astype(jnp.float32)[:, None],
        w3f.astype(matmul_dtype), params["b3"].astype(jnp.float32)[:, None],
    )


def encoder_block(x_t, prepared, *, batch_tile=512, out_dtype=jnp.bfloat16):
    """Run the encoder block.

    x_t: (n_genes, B) activations, features-major (features on sublanes, batch on lanes).
         Keep activations in this layout across the network so no boundary transposes are
         needed. Accepts f32 (cast to bf16 happens inside the kernel).
    prepared: output of prepare_encoder_params().
    Returns (hidden_num, B) of `out_dtype` (features-major, lane-dense stores).
    """
    n_genes, B = x_t.shape
    hidden_num = prepared[6].shape[0]

    # Tile quantum = 256 lanes: full-width column blocks for the 2x256^2 MXU (v6e/v7x),
    # and still a 128-multiple for v5e. Cap the tile so the batch grid has >= ~4 steps
    # when B allows it (>= 2 steps per TensorCore on v7x -> per-core DMA pipelining).
    quantum = 2 * _LANE
    bt = _round_up(max(batch_tile, quantum), quantum)
    tb = min(bt, _round_up(pl.cdiv(B, 4), quantum))
    tb = max(tb, quantum)

    # Pad B to a tile multiple (lane-dense stores, no giant un-pipelined fallback block).
    Bp = _round_up(B, tb)
    if Bp != B:
        x_t = jnp.pad(x_t, ((0, 0), (0, Bp - B)))
    grid = (Bp // tb,)

    x_spec = pl.BlockSpec((n_genes, tb), lambda i: (0, i))
    out_spec = pl.BlockSpec((hidden_num, tb), lambda i: (0, i))
    # Weights/biases: full-array blocks with a constant index map -> fetched once,
    # VMEM-resident across all batch-grid iterations.
    const_specs = [pl.BlockSpec(p.shape, lambda i: (0, 0)) for p in prepared]

    out = pl.pallas_call(
        encoder_block_kernel,
        out_shape=jax.ShapeDtypeStruct((hidden_num, Bp), out_dtype),
        grid=grid,
        in_specs=[x_spec] + const_specs,
        out_specs=out_spec,
        compiler_params=pltpu.CompilerParams(
            # batch axis is embarrassingly parallel -> megacore sharding on v7x,
            # software-pipelined x/out DMA on all generations.
            dimension_semantics=("parallel",),
        ),
    )(x_t, *prepared)

    return out[:, :B] if Bp != B else out


def _init_params(key, n_genes, t1, t2, t3, hidden_num):
    """Deterministic Linear params, PyTorch layout: W (out, in), b (out,)."""
    ks = jax.random.split(key, 8)

    def lin(kw, kb, fan_in, fan_out):
        bound = 1.0 / jnp.sqrt(fan_in)
        w = jax.random.uniform(kw, (fan_out, fan_in), jnp.float32, -bound, bound)
        b = jax.random.uniform(kb, (fan_out,), jnp.float32, -bound, bound)
        return w, b

    w0, b0 = lin(ks[0], ks[1], n_genes, t1)
    w1, b1 = lin(ks[2], ks[3], t1, t2)
    w2, b2 = lin(ks[4], ks[5], t2, t3)
    w3, b3 = lin(ks[6], ks[7], t3, hidden_num)
    return dict(w0=w0, b0=b0, w1=w1, b1=b1, w2=w2, b2=b2, w3=w3, b3=b3)


if __name__ == "__main__":
    key = jax.random.PRNGKey(0)
    B, n_genes = 1024, 32                     # grid of 4 batch tiles (256 lanes each)
    t1, t2, t3, hidden_num = 16, 16, 16, 8

    k_x, k_p, k_a1, k_a2, k_a3 = jax.random.split(key, 5)
    # Activations produced directly in features-major (n_genes, B) layout — no boundary
    # transpose feeding the kernel.
    x_t = jax.random.normal(k_x, (n_genes, B), jnp.float32)
    params = _init_params(k_p, n_genes, t1, t2, t3, hidden_num)
    adj1 = jax.random.uniform(k_a1, (t1, t1), jnp.float32)
    adj2 = jax.random.uniform(k_a2, (t2, t2), jnp.float32)
    adj3 = jax.random.uniform(k_a3, (t3, t3), jnp.float32)

    # One-time prep (adj fold + bf16 cast), then the kernel call.
    prepared = prepare_encoder_params(params, adj1, adj2, adj3)
    out_t = encoder_block(x_t, prepared)      # (hidden_num, B) bf16
    jax.block_until_ready(out_t)

    # Pure-JAX f32 reference, exactly the PyTorch math (un-fused, batch-major).
    def lrelu(v):
        return jnp.where(v > 0, v, 0.2 * v)

    x = x_t.T                                  # (B, n_genes), reference only
    h = lrelu(x @ params["w0"].T + params["b0"])
    h = (adj1 @ h.T).T
    h = lrelu(h @ params["w1"].T + params["b1"])
    h = (adj2 @ h.T).T
    h = lrelu(h @ params["w2"].T + params["b2"])
    h = (adj3 @ h.T).T
    ref = lrelu(h @ params["w3"].T + params["b3"])             # (B, hidden_num)

    assert out_t.shape == (hidden_num, B)
    # bf16 matmuls + bf16 output + adj-fold reassociation -> loose tolerance vs f32 ref.
    assert jnp.allclose(out_t.astype(jnp.float32), ref.T, atol=5e-2, rtol=5e-2)
    print("KERNEL_OK")
</pallas_src>

<mosaic_0001>
module attributes {stable_mosaic.version = 11 : i64} {
  func.func @encoder_block_kernel(%arg0: i32, %arg1: memref<32x256xf32, #tpu.memory_space<vmem>>, %arg2: memref<16x32xbf16, #tpu.memory_space<vmem>>, %arg3: memref<16x1xf32, #tpu.memory_space<vmem>>, %arg4: memref<16x16xbf16, #tpu.memory_space<vmem>>, %arg5: memref<16x1xf32, #tpu.memory_space<vmem>>, %arg6: memref<16x16xbf16, #tpu.memory_space<vmem>>, %arg7: memref<16x1xf32, #tpu.memory_space<vmem>>, %arg8: memref<8x16xbf16, #tpu.memory_space<vmem>>, %arg9: memref<8x1xf32, #tpu.memory_space<vmem>>, %arg10: memref<8x256xbf16, #tpu.memory_space<vmem>>) attributes {dimension_semantics = [#tpu.dimension_semantics<parallel>], iteration_bounds = array<i64: 4>, scalar_prefetch = 0 : i64, scratch_operands = 0 : i64, tpu.core_type = #tpu.core_type<tc>, window_params = [{transform_indices = @transform_0, window_bounds = array<i64: 32, 256>}, {pipeline_mode = #tpu.pipeline_mode<synchronous>, transform_indices = @transform_1, window_bounds = array<i64: 16, 32>}, {pipeline_mode = #tpu.pipeline_mode<synchronous>, transform_indices = @transform_2, window_bounds = array<i64: 16, 1>}, {pipeline_mode = #tpu.pipeline_mode<synchronous>, transform_indices = @transform_3, window_bounds = array<i64: 16, 16>}, {pipeline_mode = #tpu.pipeline_mode<synchronous>, transform_indices = @transform_4, window_bounds = array<i64: 16, 1>}, {pipeline_mode = #tpu.pipeline_mode<synchronous>, transform_indices = @transform_5, window_bounds = array<i64: 16, 16>}, {pipeline_mode = #tpu.pipeline_mode<synchronous>, transform_indices = @transform_6, window_bounds = array<i64: 16, 1>}, {pipeline_mode = #tpu.pipeline_mode<synchronous>, transform_indices = @transform_7, window_bounds = array<i64: 8, 16>}, {pipeline_mode = #tpu.pipeline_mode<synchronous>, transform_indices = @transform_8, window_bounds = array<i64: 8, 1>}, {transform_indices = @transform_9, window_bounds = array<i64: 8, 256>}]} {
    %c0 = arith.constant 0 : index
    %c0_0 = arith.constant 0 : index
    %0 = vector.load %arg1[%c0, %c0_0] : memref<32x256xf32, #tpu.memory_space<vmem>>, vector<32x256xf32>
    %1 = arith.truncf %0 : vector<32x256xf32> to vector<32x256xbf16>
    %c0_1 = arith.constant 0 : index
    %c0_2 = arith.constant 0 : index
    %2 = vector.load %arg2[%c0_1, %c0_2] : memref<16x32xbf16, #tpu.memory_space<vmem>>, vector<16x32xbf16>
    %cst = arith.constant dense<0.000000e+00> : vector<16x256xf32>
    %3 = tpu.matmul %2, %1, %cst {dimension_numbers = #tpu.dot_dimension_numbers<[1], [0], [0], [1], [0, 0, 1, 1], [], []>} : vector<16x32xbf16>, vector<32x256xbf16>, vector<16x256xf32> -> vector<16x256xf32>
    %c0_3 = arith.constant 0 : index
    %c0_4 = arith.constant 0 : index
    %4 = vector.load %arg3[%c0_3, %c0_4] : memref<16x1xf32, #tpu.memory_space<vmem>>, vector<16x1xf32>
    %5 = vector.broadcast %4 : vector<16x1xf32> to vector<16x256xf32>
    %6 = arith.addf %3, %5 : vector<16x256xf32>
    %cst_5 = arith.constant 0.000000e+00 : f32
    %7 = vector.broadcast %cst_5 : f32 to vector<16x256xf32>
    %8 = arith.cmpf ogt, %6, %7 : vector<16x256xf32>
    %cst_6 = arith.constant 2.000000e-01 : f32
    %9 = vector.broadcast %cst_6 : f32 to vector<16x256xf32>
    %10 = arith.mulf %9, %6 : vector<16x256xf32>
    %11 = arith.select %8, %6, %10 : vector<16x256xi1>, vector<16x256xf32>
    %c0_7 = arith.constant 0 : index
    %c0_8 = arith.constant 0 : index
    %12 = vector.load %arg4[%c0_7, %c0_8] : memref<16x16xbf16, #tpu.memory_space<vmem>>, vector<16x16xbf16>
    %13 = arith.truncf %11 : vector<16x256xf32> to vector<16x256xbf16>
    %cst_9 = arith.constant dense<0.000000e+00> : vector<16x256xf32>
    %14 = tpu.matmul %12, %13, %cst_9 {dimension_numbers = #tpu.dot_dimension_numbers<[1], [0], [0], [1], [0, 0, 1, 1], [], []>} : vector<16x16xbf16>, vector<16x256xbf16>, vector<16x256xf32> -> vector<16x256xf32>
    %c0_10 = arith.constant 0 : index
    %c0_11 = arith.constant 0 : index
    %15 = vector.load %arg5[%c0_10, %c0_11] : memref<16x1xf32, #tpu.memory_space<vmem>>, vector<16x1xf32>
    %16 = vector.broadcast %15 : vector<16x1xf32> to vector<16x256xf32>
    %17 = arith.addf %14, %16 : vector<16x256xf32>
    %cst_12 = arith.constant 0.000000e+00 : f32
    %18 = vector.broadcast %cst_12 : f32 to vector<16x256xf32>
    %19 = arith.cmpf ogt, %17, %18 : vector<16x256xf32>
    %cst_13 = arith.constant 2.000000e-01 : f32
    %20 = vector.broadcast %cst_13 : f32 to vector<16x256xf32>
    %21 = arith.mulf %20, %17 : vector<16x256xf32>
    %22 = arith.select %19, %17, %21 : vector<16x256xi1>, vector<16x256xf32>
    %c0_14 = arith.constant 0 : index
    %c0_15 = arith.constant 0 : index
    %23 = vector.load %arg6[%c0_14, %c0_15] : memref<16x16xbf16, #tpu.memory_space<vmem>>, vector<16x16xbf16>
    %24 = arith.truncf %22 : vector<16x256xf32> to vector<16x256xbf16>
    %cst_16 = arith.constant dense<0.000000e+00> : vector<16x256xf32>
    %25 = tpu.matmul %23, %24, %cst_16 {dimension_numbers = #tpu.dot_dimension_numbers<[1], [0], [0], [1], [0, 0, 1, 1], [], []>} : vector<16x16xbf16>, vector<16x256xbf16>, vector<16x256xf32> -> vector<16x256xf32>
    %c0_17 = arith.constant 0 : index
    %c0_18 = arith.constant 0 : index
    %26 = vector.load %arg7[%c0_17, %c0_18] : memref<16x1xf32, #tpu.memory_space<vmem>>, vector<16x1xf32>
    %27 = vector.broadcast %26 : vector<16x1xf32> to vector<16x256xf32>
    %28 = arith.addf %25, %27 : vector<16x256xf32>
    %cst_19 = arith.constant 0.000000e+00 : f32
    %29 = vector.broadcast %cst_19 : f32 to vector<16x256xf32>
    %30 = arith.cmpf ogt, %28, %29 : vector<16x256xf32>
    %cst_20 = arith.constant 2.000000e-01 : f32
    %31 = vector.broadcast %cst_20 : f32 to vector<16x256xf32>
    %32 = arith.mulf %31, %28 : vector<16x256xf32>
    %33 = arith.select %30, %28, %32 : vector<16x256xi1>, vector<16x256xf32>
    %c0_21 = arith.constant 0 : index
    %c0_22 = arith.constant 0 : index
    %34 = vector.load %arg8[%c0_21, %c0_22] : memref<8x16xbf16, #tpu.memory_space<vmem>>, vector<8x16xbf16>
    %35 = arith.truncf %33 : vector<16x256xf32> to vector<16x256xbf16>
    %cst_23 = arith.constant dense<0.000000e+00> : vector<8x256xf32>
    %36 = tpu.matmul %34, %35, %cst_23 {dimension_numbers = #tpu.dot_dimension_numbers<[1], [0], [0], [1], [0, 0, 1, 1], [], []>} : vector<8x16xbf16>, vector<16x256xbf16>, vector<8x256xf32> -> vector<8x256xf32>
    %c0_24 = arith.constant 0 : index
    %c0_25 = arith.constant 0 : index
    %37 = vector.load %arg9[%c0_24, %c0_25] : memref<8x1xf32, #tpu.memory_space<vmem>>, vector<8x1xf32>
    %38 = vector.broadcast %37 : vector<8x1xf32> to vector<8x256xf32>
    %39 = arith.addf %36, %38 : vector<8x256xf32>
    %cst_26 = arith.constant 0.000000e+00 : f32
    %40 = vector.broadcast %cst_26 : f32 to vector<8x256xf32>
    %41 = arith.cmpf ogt, %39, %40 : vector<8x256xf32>
    %cst_27 = arith.constant 2.000000e-01 : f32
    %42 = vector.broadcast %cst_27 : f32 to vector<8x256xf32>
    %43 = arith.mulf %42, %39 : vector<8x256xf32>
    %44 = arith.select %41, %39, %43 : vector<8x256xi1>, vector<8x256xf32>
    %45 = arith.truncf %44 : vector<8x256xf32> to vector<8x256xbf16>
    %c0_28 = arith.constant 0 : index
    %c0_29 = arith.constant 0 : index
    %46 = vector.load %arg10[%c0_28, %c0_29] : memref<8x256xbf16, #tpu.memory_space<vmem>>, vector<8x256xbf16>
    tpu.vector_store %arg10[%c0_28, %c0_29], %45 {strides = array<i32>} : memref<8x256xbf16, #tpu.memory_space<vmem>>, vector<8x256xbf16>,
    return
  }
  func.func @transform_0(%arg0: i32) -> (i32, i32) {
    %c0_i32 = arith.constant 0 : i32
    %c0_i32_0 = arith.constant 0 : i32
    return %c0_i32, %arg0 : i32, i32
  }
  func.func @transform_1(%arg0: i32) -> (i32, i32) {
    %c0_i32 = arith.constant 0 : i32
    %c0_i32_0 = arith.constant 0 : i32
    %c0_i32_1 = arith.constant 0 : i32
    return %c0_i32, %c0_i32_0 : i32, i32
  }
  func.func @transform_2(%arg0: i32) -> (i32, i32) {
    %c0_i32 = arith.constant 0 : i32
    %c0_i32_0 = arith.constant 0 : i32
    %c0_i32_1 = arith.constant 0 : i32
    return %c0_i32, %c0_i32_0 : i32, i32
  }
  func.func @transform_3(%arg0: i32) -> (i32, i32) {
    %c0_i32 = arith.constant 0 : i32
    %c0_i32_0 = arith.constant 0 : i32
    %c0_i32_1 = arith.constant 0 : i32
    return %c0_i32, %c0_i32_0 : i32, i32
  }
  func.func @transform_4(%arg0: i32) -> (i32, i32) {
    %c0_i32 = arith.constant 0 : i32
    %c0_i32_0 = arith.constant 0 : i32
    %c0_i32_1 = arith.constant 0 : i32
    return %c0_i32, %c0_i32_0 : i32, i32
  }
  func.func @transform_5(%arg0: i32) -> (i32, i32) {
    %c0_i32 = arith.constant 0 : i32
    %c0_i32_0 = arith.constant 0 : i32
    %c0_i32_1 = arith.constant 0 : i32
    return %c0_i32, %c0_i32_0 : i32, i32
  }
  func.func @transform_6(%arg0: i32) -> (i32, i32) {
    %c0_i32 = arith.constant 0 : i32
    %c0_i32_0 = arith.constant 0 : i32
    %c0_i32_1 = arith.constant 0 : i32
    return %c0_i32, %c0_i32_0 : i32, i32
  }
  func.func @transform_7(%arg0: i32) -> (i32, i32) {
    %c0_i32 = arith.constant 0 : i32
    %c0_i32_0 = arith.constant 0 : i32
    %c0_i32_1 = arith.constant 0 : i32
    return %c0_i32, %c0_i32_0 : i32, i32
  }
  func.func @transform_8(%arg0: i32) -> (i32, i32) {
    %c0_i32 = arith.constant 0 : i32
    %c0_i32_0 = arith.constant 0 : i32
    %c0_i32_1 = arith.constant 0 : i32
    return %c0_i32, %c0_i32_0 : i32, i32
  }
  func.func @transform_9(%arg0: i32) -> (i32, i32) {
    %c0_i32 = arith.constant 0 : i32
    %c0_i32_0 = arith.constant 0 : i32
    return %c0_i32, %arg0 : i32, i32
  }
}

</mosaic_0001>

<llo_original>
// kernel: tpu_custom_call.1
$region0: #{tpu_custom_call.1}
  #allocation0 [shape = 'u32[]', space=smem, size = 0x4, offset = 0x4, fixed_abs, tag = 'smem constant byte address 0x4 - core index']
  #allocation1 [shape = 'u32[72,128]{1,0:T(1,128)}', space=vmem, size = 0x9000, scoped, tag = 'internal scratch']
  %s0 = inlined_call_operand.hbm [shape: f32[32,1024], index: 0, kind: input, shape index: {}]
  %s1 = inlined_call_operand.vmem [shape: bf16[16,32], index: 1, kind: input, shape index: {}]
  %s2 = inlined_call_operand.vmem [shape: f32[16,1], index: 2, kind: input, shape index: {}]
  %s3 = inlined_call_operand.vmem [shape: bf16[16,16], index: 3, kind: input, shape index: {}]
  %s4 = inlined_call_operand.vmem [shape: f32[16,1], index: 4, kind: input, shape index: {}]
  %s5 = inlined_call_operand.vmem [shape: bf16[16,16], index: 5, kind: input, shape index: {}]
  %s6 = inlined_call_operand.vmem [shape: f32[16,1], index: 6, kind: input, shape index: {}]
  %s7 = inlined_call_operand.vmem [shape: bf16[8,16], index: 7, kind: input, shape index: {}]
  %s8 = inlined_call_operand.vmem [shape: f32[8,1], index: 8, kind: input, shape index: {}]
  %s9 = inlined_call_operand.hbm [shape: bf16[8,1024], index: 9, kind: output, shape index: {}]
  %s10 = sld [smem:[#allocation0]]
  $region73: #{tpu_custom_call.1} parent=0
    _
  %s12 = ssub.s32 1, %s10
  %s13 = scalar_select 0, %s12, %s10
  $region1: #{tpu_custom_call.1} parent=0
    #allocation2 [shape = 'u8[65536]{0}', space=vmem, size = 0x10000, scoped, tag = 'input window, operand 0']
    #allocation3 [shape = 's32[2]{0}', space=sflag, size = 0x8, scoped, tag = 'scoped memory for tpu_custom_call.1']
    #allocation4 [shape = 's32[2]{0}', space=sflag, size = 0x8, scoped, tag = 'scoped memory for tpu_custom_call.1']
    #allocation5 [shape = 'u8[8192]{0}', space=vmem, size = 0x2000, scoped, tag = 'output window, operand 0']
    %14 = vsyncpa [#allocation3], 0
    %s15 = scalar_lea.sflag [#allocation3], 1
    %16 = vsyncpa %s15, 0
    %17 = vsyncpa [#allocation4], 0
    %s18 = scalar_lea.sflag [#allocation4], 1
    %19 = vsyncpa %s18, 0
    loop: start=0, step=1, limit=6
    $region2: #{tpu_custom_call.1} parent=1 // loop_pre_header
      _
    $region3: #{tpu_custom_call.1} parent=1 // loop_header
      %s21 = sphi 0, %s25
      %p22 = scmp.ge.s32.totalorder %s21, 6
      %s31 = sphi 0, %s33
      %s34 = sphi 0, %s31
      %s35 = sphi 0, %s34
      %s51 = sphi 0, %s35
      %s55 = sphi 0, %s55
      %s57 = sphi 0, %s55
      %s58 = sphi 0, %s57
      %s72 = sphi 0, %s58
      %s76 = sphi 0, %s76
      %s78 = sphi 0, %s76
      %s79 = sphi 0, %s78
      %s93 = sphi 0, %s79
      %s97 = sphi 0, %s97
      %s99 = sphi 0, %s97
      %s100 = sphi 0, %s99
      %s114 = sphi 0, %s100
      %s118 = sphi 0, %s118
      %s120 = sphi 0, %s118
      %s121 = sphi 0, %s120
      %s135 = sphi 0, %s121
      %s139 = sphi 0, %s139
      %s141 = sphi 0, %s139
      %s142 = sphi 0, %s141
      %s156 = sphi 0, %s142
      %s160 = sphi 0, %s160
      %s162 = sphi 0, %s160
      %s163 = sphi 0, %s162
      %s177 = sphi 0, %s163
      %s181 = sphi 0, %s181
      %s183 = sphi 0, %s181
      %s184 = sphi 0, %s183
      %s198 = sphi 0, %s184
      %s202 = sphi 0, %s202
      %s204 = sphi 0, %s202
      %s205 = sphi 0, %s204
      %s219 = sphi 0, %s205
      %s225 = sphi 0, %s227
      %s228 = sphi 0, %s225
      %s229 = sphi 0, %s228
      %s245 = sphi 0, %s229
    $region4: #{tpu_custom_call.1} parent=1 // loop_header_branch
      %24 = sbr.rel (%p22) target = $region8
    $region5: #{tpu_custom_call.1} parent=1 // loop_body
      %s26 = ssub.s32 %s21, 1
      %s27 = ssub.s32 %s21, 2
      %s28 = sadd.s32 %s21, 1
      %s29 = ssub.s32 %s21, %s28
      %p30 = scmp.eq.s32.totalorder %s29, 0
      %s32 = sadd.s32 %s31, 1
      %s33 = scalar_select %p30, %s31, %s32
      %p36 = pneg %p30
      %p37 = scmp.eq.s32.totalorder %s21, 3
      %p38 = por %p36, %p37
      %p39 = scmp.ne.s32.totalorder %s31, %s34
      %p40 = scmp.eq.s32.totalorder %s21, 0
      %p41 = por %p39, %p40
      %p42 = scmp.ne.s32.totalorder %s31, %s34
      %p43 = scmp.eq.s32.totalorder %s26, 3
      %p44 = por %p42, %p43
      %p45 = scmp.ne.s32.totalorder %s34, %s35
      %p46 = scmp.eq.s32.totalorder %s26, 0
      %p47 = por %p45, %p46
      %p48 = scmp.ne.s32.totalorder %s34, %s35
      %p49 = scmp.eq.s32.totalorder %s27, 3
      %p50 = por %p48, %p49
      %p52 = scmp.ne.s32.totalorder %s35, %s51
      %p53 = scmp.eq.s32.totalorder %s27, 0
      %p54 = por %p52, %p53
      %s56 = sadd.s32 %s55, 1
      %p59 = scmp.eq.s32.totalorder %s21, 3
      %p60 = scmp.ne.s32.totalorder %s55, %s57
      %p61 = scmp.eq.s32.totalorder %s21, 0
      %p62 = por %p60, %p61
      %p63 = scmp.ne.s32.totalorder %s55, %s57
      %p64 = scmp.eq.s32.totalorder %s26, 3
      %p65 = por %p63, %p64
      %p66 = scmp.ne.s32.totalorder %s57, %s58
      %p67 = scmp.eq.s32.totalorder %s26, 0
      %p68 = por %p66, %p67
      %p69 = scmp.ne.s32.totalorder %s57, %s58
      %p70 = scmp.eq.s32.totalorder %s27, 3
      %p71 = por %p69, %p70
      %p73 = scmp.ne.s32.totalorder %s58, %s72
      %p74 = scmp.eq.s32.totalorder %s27, 0
      %p75 = por %p73, %p74
      %s77 = sadd.s32 %s76, 1
      %p80 = scmp.eq.s32.totalorder %s21, 3
      %p81 = scmp.ne.s32.totalorder %s76, %s78
      %p82 = scmp.eq.s32.totalorder %s21, 0
      %p83 = por %p81, %p82
      %p84 = scmp.ne.s32.totalorder %s76, %s78
      %p85 = scmp.eq.s32.totalorder %s26, 3
      %p86 = por %p84, %p85
      %p87 = scmp.ne.s32.totalorder %s78, %s79
      %p88 = scmp.eq.s32.totalorder %s26, 0
      %p89 = por %p87, %p88
      %p90 = scmp.ne.s32.totalorder %s78, %s79
      %p91 = scmp.eq.s32.totalorder %s27, 3
      %p92 = por %p90, %p91
      %p94 = scmp.ne.s32.totalorder %s79, %s93
      %p95 = scmp.eq.s32.totalorder %s27, 0
      %p96 = por %p94, %p95
      %s98 = sadd.s32 %s97, 1
      %p101 = scmp.eq.s32.totalorder %s21, 3
      %p102 = scmp.ne.s32.totalorder %s97, %s99
      %p103 = scmp.eq.s32.totalorder %s21, 0
      %p104 = por %p102, %p103
      %p105 = scmp.ne.s32.totalorder %s97, %s99
      %p106 = scmp.eq.s32.totalorder %s26, 3
      %p107 = por %p105, %p106
      %p108 = scmp.ne.s32.totalorder %s99, %s100
      %p109 = scmp.eq.s32.totalorder %s26, 0
      %p110 = por %p108, %p109
      %p111 = scmp.ne.s32.totalorder %s99, %s100
      %p112 = scmp.eq.s32.totalorder %s27, 3
      %p113 = por %p111, %p112
      %p115 = scmp.ne.s32.totalorder %s100, %s114
      %p116 = scmp.eq.s32.totalorder %s27, 0
      %p117 = por %p115, %p116
      %s119 = sadd.s32 %s118, 1
      %p122 = scmp.eq.s32.totalorder %s21, 3
      %p123 = scmp.ne.s32.totalorder %s118, %s120
      %p124 = scmp.eq.s32.totalorder %s21, 0
      %p125 = por %p123, %p124
      %p126 = scmp.ne.s32.totalorder %s118, %s120
      %p127 = scmp.eq.s32.totalorder %s26, 3
      %p128 = por %p126, %p127
      %p129 = scmp.ne.s32.totalorder %s120, %s121
      %p130 = scmp.eq.s32.totalorder %s26, 0
      %p131 = por %p129, %p130
      %p132 = scmp.ne.s32.totalorder %s120, %s121
      %p133 = scmp.eq.s32.totalorder %s27, 3
      %p134 = por %p132, %p133
      %p136 = scmp.ne.s32.totalorder %s121, %s135
      %p137 = scmp.eq.s32.totalorder %s27, 0
      %p138 = por %p136, %p137
      %s140 = sadd.s32 %s139, 1
      %p143 = scmp.eq.s32.totalorder %s21, 3
      %p144 = scmp.ne.s32.totalorder %s139, %s141
      %p145 = scmp.eq.s32.totalorder %s21, 0
      %p146 = por %p144, %p145
      %p147 = scmp.ne.s32.totalorder %s139, %s141
      %p148 = scmp.eq.s32.totalorder %s26, 3
      %p149 = por %p147, %p148
      %p150 = scmp.ne.s32.totalorder %s141, %s142
      %p151 = scmp.eq.s32.totalorder %s26, 0
      %p152 = por %p150, %p151
      %p153 = scmp.ne.s32.totalorder %s141, %s142
      %p154 = scmp.eq.s32.totalorder %s27, 3
      %p155 = por %p153, %p154
      %p157 = scmp.ne.s32.totalorder %s142, %s156
      %p158 = scmp.eq.s32.totalorder %s27, 0
      %p159 = por %p157, %p158
      %s161 = sadd.s32 %s160, 1
      %p164 = scmp.eq.s32.totalorder %s21, 3
      %p165 = scmp.ne.s32.totalorder %s160, %s162
      %p166 = scmp.eq.s32.totalorder %s21, 0
      %p167 = por %p165, %p166
      %p168 = scmp.ne.s32.totalorder %s160, %s162
      %p169 = scmp.eq.s32.totalorder %s26, 3
      %p170 = por %p168, %p169
      %p171 = scmp.ne.s32.totalorder %s162, %s163
      %p172 = scmp.eq.s32.totalorder %s26, 0
      %p173 = por %p171, %p172
      %p174 = scmp.ne.s32.totalorder %s162, %s163
      %p175 = scmp.eq.s32.totalorder %s27, 3
      %p176 = por %p174, %p175
      %p178 = scmp.ne.s32.totalorder %s163, %s177
      %p179 = scmp.eq.s32.totalorder %s27, 0
      %p180 = por %p178, %p179
      %s182 = sadd.s32 %s181, 1
      %p185 = scmp.eq.s32.totalorder %s21, 3
      %p186 = scmp.ne.s32.totalorder %s181, %s183
      %p187 = scmp.eq.s32.totalorder %s21, 0
      %p188 = por %p186, %p187
      %p189 = scmp.ne.s32.totalorder %s181, %s183
      %p190 = scmp.eq.s32.totalorder %s26, 3
      %p191 = por %p189, %p190
      %p192 = scmp.ne.s32.totalorder %s183, %s184
      %p193 = scmp.eq.s32.totalorder %s26, 0
      %p194 = por %p192, %p193
      %p195 = scmp.ne.s32.totalorder %s183, %s184
      %p196 = scmp.eq.s32.totalorder %s27, 3
      %p197 = por %p195, %p196
      %p199 = scmp.ne.s32.totalorder %s184, %s198
      %p200 = scmp.eq.s32.totalorder %s27, 0
      %p201 = por %p199, %p200
      %s203 = sadd.s32 %s202, 1
      %p206 = scmp.eq.s32.totalorder %s21, 3
      %p207 = scmp.ne.s32.totalorder %s202, %s204
      %p208 = scmp.eq.s32.totalorder %s21, 0
      %p209 = por %p207, %p208
      %p210 = scmp.ne.s32.totalorder %s202, %s204
      %p211 = scmp.eq.s32.totalorder %s26, 3
      %p212 = por %p210, %p211
      %p213 = scmp.ne.s32.totalorder %s204, %s205
      %p214 = scmp.eq.s32.totalorder %s26, 0
      %p215 = por %p213, %p214
      %p216 = scmp.ne.s32.totalorder %s204, %s205
      %p217 = scmp.eq.s32.totalorder %s27, 3
      %p218 = por %p216, %p217
      %p220 = scmp.ne.s32.totalorder %s205, %s219
      %p221 = scmp.eq.s32.totalorder %s27, 0
      %p222 = por %p220, %p221
      %s223 = ssub.s32 %s21, %s28
      %p224 = scmp.eq.s32.totalorder %s223, 0
      %s226 = sadd.s32 %s225, 1
      %s227 = scalar_select %p224, %s225, %s226
      %p230 = pneg %p224
      %p231 = scmp.eq.s32.totalorder %s21, 3
      %p232 = por %p230, %p231
      %p233 = scmp.ne.s32.totalorder %s225, %s228
      %p234 = scmp.eq.s32.totalorder %s21, 0
      %p235 = por %p233, %p234
      %p236 = scmp.ne.s32.totalorder %s225, %s228
      %p237 = scmp.eq.s32.totalorder %s26, 3
      %p238 = por %p236, %p237
      %p239 = scmp.ne.s32.totalorder %s228, %s229
      %p240 = scmp.eq.s32.totalorder %s26, 0
      %p241 = por %p239, %p240
      %p242 = scmp.ne.s32.totalorder %s228, %s229
      %p243 = scmp.eq.s32.totalorder %s27, 3
      %p244 = por %p242, %p243
      %p246 = scmp.ne.s32.totalorder %s229, %s245
      %p247 = scmp.eq.s32.totalorder %s27, 0
      %p248 = por %p246, %p247
      %p249 = scmp.le.s32.totalorder 1, %s21
      %p250 = scmp.lt.s32.totalorder %s21, 5
      %p251 = pnand %p249, %p250
      %p252 = pneg %p251
      // Predicated region
      $region9: #{tpu_custom_call.1} parent=5 // pred_check
        _
      $region10: #{tpu_custom_call.1} parent=5 // pred_check_branch
        %254 = sbr.rel (%p251) target = $region12
      $region11: #{tpu_custom_call.1} parent=5 // pred_region
        %s255 = ssub.s32 %s21, 1
        // Predicated region
        $region13: #{tpu_custom_call.1} parent=11 // pred_check
          %p256 = pneg %p68
        $region14: #{tpu_custom_call.1} parent=11 // pred_check_branch
          %258 = sbr.rel (%p256) target = $region16
        $region15: #{tpu_custom_call.1} parent=11 // pred_region
          _
        $region16: #{tpu_custom_call.1} parent=11 // pred_fallthru
          _
        // Predicated region
        $region17: #{tpu_custom_call.1} parent=11 // pred_check
          %p259 = pneg %p89
        $region18: #{tpu_custom_call.1} parent=11 // pred_check_branch
          %261 = sbr.rel (%p259) target = $region20
        $region19: #{tpu_custom_call.1} parent=11 // pred_region
          _
        $region20: #{tpu_custom_call.1} parent=11 // pred_fallthru
          _
        // Predicated region
        $region21: #{tpu_custom_call.1} parent=11 // pred_check
          %p262 = pneg %p110
        $region22: #{tpu_custom_call.1} parent=11 // pred_check_branch
          %264 = sbr.rel (%p262) target = $region24
        $region23: #{tpu_custom_call.1} parent=11 // pred_region
          _
        $region24: #{tpu_custom_call.1} parent=11 // pred_fallthru
          _
        // Predicated region
        $region25: #{tpu_custom_call.1} parent=11 // pred_check
          %p265 = pneg %p131
        $region26: #{tpu_custom_call.1} parent=11 // pred_check_branch
          %267 = sbr.rel (%p265) target = $region28
        $region27: #{tpu_custom_call.1} parent=11 // pred_region
          _
        $region28: #{tpu_custom_call.1} parent=11 // pred_fallthru
          _
        // Predicated region
        $region29: #{tpu_custom_call.1} parent=11 // pred_check
          %p268 = pneg %p152
        $region30: #{tpu_custom_call.1} parent=11 // pred_check_branch
          %270 = sbr.rel (%p268) target = $region32
        $region31: #{tpu_custom_call.1} parent=11 // pred_region
          _
        $region32: #{tpu_custom_call.1} parent=11 // pred_fallthru
          _
        // Predicated region
        $region33: #{tpu_custom_call.1} parent=11 // pred_check
          %p271 = pneg %p173
        $region34: #{tpu_custom_call.1} parent=11 // pred_check_branch
          %273 = sbr.rel (%p271) target = $region36
        $region35: #{tpu_custom_call.1} parent=11 // pred_region
          _
        $region36: #{tpu_custom_call.1} parent=11 // pred_fallthru
          _
        // Predicated region
        $region37: #{tpu_custom_call.1} parent=11 // pred_check
          %p274 = pneg %p194
        $region38: #{tpu_custom_call.1} parent=11 // pred_check_branch
          %276 = sbr.rel (%p274) target = $region40
        $region39: #{tpu_custom_call.1} parent=11 // pred_region
          _
        $region40: #{tpu_custom_call.1} parent=11 // pred_fallthru
          _
        // Predicated region
        $region41: #{tpu_custom_call.1} parent=11 // pred_check
          %p277 = pneg %p215
        $region42: #{tpu_custom_call.1} parent=11 // pred_check_branch
          %279 = sbr.rel (%p277) target = $region44
        $region43: #{tpu_custom_call.1} parent=11 // pred_region
          _
        $region44: #{tpu_custom_call.1} parent=11 // pred_fallthru
          _
      $region12: #{tpu_custom_call.1} parent=5 // pred_fallthru
        _
      %p280 = scmp.lt.s32.totalorder %s21, 4
      // Predicated region
      $region45: #{tpu_custom_call.1} parent=5 // pred_check
        %p281 = pneg %p280
      $region46: #{tpu_custom_call.1} parent=5 // pred_check_branch
        %283 = sbr.rel (%p281) target = $region48
      $region47: #{tpu_custom_call.1} parent=5 // pred_region
        // Predicated region
        $region49: #{tpu_custom_call.1} parent=47 // pred_check
          %p284 = pneg %p41
        $region50: #{tpu_custom_call.1} parent=47 // pred_check_branch
          %286 = sbr.rel (%p284) target = $region52
        $region51: #{tpu_custom_call.1} parent=47 // pred_region
          %s287 = sand.u32 %s31, 1
          %s288 = scalar_lea.sflag [#allocation3], %s287
          %s289 = sand.u32 %s31, 1
          %s290 = smul.addr %s289, 64
          %s291 = scalar_lea.vmem [#allocation2], %s290
          %s292 = smul.u32 2, %s21
          %294 = vsyncadd %s288, 0
          %s295 = smul.addr %s292, 8
          %s296 = scalar_lea.hbm %s0, %s295
          %s297 = sshll.u32 %s296, 4
          %s298 = int_to_ptr.hbm [resolvable:$true] %s297
          %s299 = sshll.u32 %s291, 4
          %s300 = int_to_ptr.vmem [resolvable:$true] %s299
          %305 = dma.hbm_to_vmem [thread:$0]  %s298, 1024, %s300, %s288, 1024, 256, 16
        $region52: #{tpu_custom_call.1} parent=47 // pred_fallthru
          _
      $region48: #{tpu_custom_call.1} parent=5 // pred_fallthru
        _
      %p306 = scmp.le.s32.totalorder 1, %s21
      %p307 = scmp.lt.s32.totalorder %s21, 5
      %p308 = pnand %p306, %p307
      %p309 = pneg %p308
      // Predicated region
      $region53: #{tpu_custom_call.1} parent=5 // pred_check
        _
      $region54: #{tpu_custom_call.1} parent=5 // pred_check_branch
        %311 = sbr.rel (%p308) target = $region56
      $region55: #{tpu_custom_call.1} parent=5 // pred_region
        %s312 = ssub.s32 %s21, 1
        %s313 = sand.u32 %s34, 1
        %s314 = scalar_lea.sflag [#allocation3], %s313
        %s315 = sand.u32 %s34, 1
        %s316 = smul.addr %s315, 64
        %s317 = scalar_lea.vmem [#allocation2], %s316
        // Predicated region
        $region57: #{tpu_custom_call.1} parent=55 // pred_check
          %p318 = pneg %p47
        $region58: #{tpu_custom_call.1} parent=55 // pred_check_branch
          %320 = sbr.rel (%p318) target = $region60
        $region59: #{tpu_custom_call.1} parent=55 // pred_region
          %322 = dma.done %s314, 1024
        $region60: #{tpu_custom_call.1} parent=55 // pred_fallthru
          _
        %s323 = sand.u32 %s34, 1
        %s324 = scalar_lea.sflag [#allocation3], %s323
        %s325 = sand.u32 %s34, 1
        %s326 = smul.addr %s325, 64
        %s327 = scalar_lea.vmem [#allocation2], %s326
        %p328 = pneg %p47
        %p329 = pneg %p44
        %p330 = pneg %p68
        %p331 = pneg %p65
        %p332 = pneg %p89
        %p333 = pneg %p86
        %p334 = pneg %p110
        %p335 = pneg %p107
        %p336 = pneg %p131
        %p337 = pneg %p128
        %p338 = pneg %p152
        %p339 = pneg %p149
        %p340 = pneg %p173
        %p341 = pneg %p170
        %p342 = pneg %p194
        %p343 = pneg %p191
        %p344 = pneg %p215
        %p345 = pneg %p212
        %p346 = pneg %p241
        %p347 = pneg %p238
        %s348 = sand.u32 %s228, 1
        %s349 = scalar_lea.sflag [#allocation4], %s348
        %s350 = sand.u32 %s228, 1
        %s351 = smul.addr %s350, 8
        %s352 = scalar_lea.vmem [#allocation5], %s351
        %s353 = smul.u32 2, %s26
        %s354 = smul.u32 2, %s26
        %v356 = vld [vmem:[%s317] sm:$0xff]
        %v357 = vld [vmem:[%s317 + $0x8] sm:$0xff]
        %v358 = vld [vmem:[%s317 + $0x10] sm:$0xff]
        %v359 = vld [vmem:[%s317 + $0x18] sm:$0xff]
        %v360 = vld [vmem:[%s317 + $0x20] sm:$0xff]
        %v361 = vld [vmem:[%s317 + $0x28] sm:$0xff]
        %v362 = vld [vmem:[%s317 + $0x30] sm:$0xff]
        %v363 = vld [vmem:[%s317 + $0x38] sm:$0xff]
        %v364 = vpack.c.bf16 %v358, %v356
        %v365 = vpack.c.bf16 %v359, %v357
        %v366 = vpack.c.bf16 %v362, %v360
        %v367 = vpack.c.bf16 %v363, %v361
        %v368 = vld [vmem:[%s1] sm:$0xf]
        %v369 = vld [vmem:[%s1 + $0x4] sm:$0xf]
        %v370 = vld [vmem:[%s2] sm:$0xff]
        %v371 = vld [vmem:[%s2 + $0x8] sm:$0xff]
        %373 = vset.pattern.permute.xlu0 0
        %374 = vperm.xlu0 %373, %v370
        %v375 = vpop.permute.xlu0 %374
        %378 = vset.pattern.permute.xlu0 0
        %379 = vperm.xlu0 %378, %v371
        %v380 = vpop.permute.xlu0 %379
        %v384 = vunpack.c.l.b16 %v368
        %v385 = vunpack.c.l.b16 %v369
        %v386 = vpack.c.b16 %v385, %v384
        %vm387 = vcmask 261120
        %v389 = vsel %vm387, %v386, 0
        %391 = vmatpush.bf16.msra.mxu0 0
        %392 = vmatpush.bf16.msra.mxu0 0
        %393 = vmatpush.bf16.msra.mxu0 0
        %394 = vmatpush.bf16.msra.mxu0 0
        %395 = vmatpush.bf16.msra.mxu0 0
        %396 = vmatpush.bf16.msra.mxu0 0
        %397 = vmatpush.bf16.msra.mxu0 %v366
        %398 = vmatpush.bf16.msra.mxu0 %v364
        %399 = vmatmul.bf16.gmra.mxu0 %v389
        %v400 = vpop.f32.mrf.mxu0
        %v401 = vadd.f32 %v375, %v400
        %v402 = vpop.f32.mrf.mxu0
        %v403 = vadd.f32 %v380, %v402
        %404 = vdwg.mxu0
        %405 = vmatpush.bf16.msra.mxu0 0
        %406 = vmatpush.bf16.msra.mxu0 0
        %407 = vmatpush.bf16.msra.mxu0 0
        %408 = vmatpush.bf16.msra.mxu0 0
        %409 = vmatpush.bf16.msra.mxu0 0
        %410 = vmatpush.bf16.msra.mxu0 0
        %411 = vmatpush.bf16.msra.mxu0 %v367
        %412 = vmatpush.bf16.msra.mxu0 %v365
        %413 = vmatmul.bf16.gmra.mxu0 %v389
        %v414 = vpop.f32.mrf.mxu0
        %v415 = vadd.f32 %v375, %v414
        %v416 = vpop.f32.mrf.mxu0
        %v417 = vadd.f32 %v380, %v416
        %418 = vdwg.mxu0
        %vm419 = vcmp.gt.f32.partialorder %v401, 0.0
        %vm420 = vcmp.gt.f32.partialorder %v415, 0.0
        %vm421 = vcmp.gt.f32.partialorder %v403, 0.0
        %vm422 = vcmp.gt.f32.partialorder %v417, 0.0
        %v423 = vmul.f32 %v401, 0.2
        %v424 = vmul.f32 %v415, 0.2
        %v425 = vmul.f32 %v403, 0.2
        %v426 = vmul.f32 %v417, 0.2
        %v427 = vsel %vm419, %v401, %v423
        %v428 = vsel %vm420, %v415, %v424
        %v429 = vsel %vm421, %v403, %v425
        %v430 = vsel %vm422, %v417, %v426
        %v431 = vld [vmem:[%s3] sm:$0xf]
        %v432 = vld [vmem:[%s3 + $0x4] sm:$0xf]
        %v433 = vpack.c.bf16 %v429, %v427
        %v434 = vpack.c.bf16 %v430, %v428
        %v435 = vld [vmem:[%s4] sm:$0xff]
        %v436 = vld [vmem:[%s4 + $0x8] sm:$0xff]
        %438 = vset.pattern.permute.xlu0 0
        %439 = vperm.xlu0 %438, %v435
        %v440 = vpop.permute.xlu0 %439
        %443 = vset.pattern.permute.xlu0 0
        %444 = vperm.xlu0 %443, %v436
        %v445 = vpop.permute.xlu0 %444
        %v449 = vunpack.c.l.b16 %v431
        %v450 = vunpack.c.l.b16 %v432
        %v451 = vpack.c.b16 %v450, %v449
        %vm452 = vcmask 130048
        %v454 = vsel %vm452, %v451, 0
        %456 = vmatpush.bf16.msra.mxu0 0
        %457 = vmatpush.bf16.msra.mxu0 0
        %458 = vmatpush.bf16.msra.mxu0 0
        %459 = vmatpush.bf16.msra.mxu0 0
        %460 = vmatpush.bf16.msra.mxu0 0
        %461 = vmatpush.bf16.msra.mxu0 0
        %462 = vmatpush.bf16.msra.mxu0 0
        %463 = vmatpush.bf16.msra.mxu0 %v433
        %464 = vmatmul.bf16.gmra.mxu0 %v454
        %v465 = vpop.f32.mrf.mxu0
        %v466 = vadd.f32 %v440, %v465
        %v467 = vpop.f32.mrf.mxu0
        %v468 = vadd.f32 %v445, %v467
        %469 = vdwg.mxu0
        %470 = vmatpush.bf16.msra.mxu0 0
        %471 = vmatpush.bf16.msra.mxu0 0
        %472 = vmatpush.bf16.msra.mxu0 0
        %473 = vmatpush.bf16.msra.mxu0 0
        %474 = vmatpush.bf16.msra.mxu0 0
        %475 = vmatpush.bf16.msra.mxu0 0
        %476 = vmatpush.bf16.msra.mxu0 0
        %477 = vmatpush.bf16.msra.mxu0 %v434
        %478 = vmatmul.bf16.gmra.mxu0 %v454
        %v479 = vpop.f32.mrf.mxu0
        %v480 = vadd.f32 %v440, %v479
        %v481 = vpop.f32.mrf.mxu0
        %v482 = vadd.f32 %v445, %v481
        %483 = vdwg.mxu0
        %vm484 = vcmp.gt.f32.partialorder %v466, 0.0
        %vm485 = vcmp.gt.f32.partialorder %v480, 0.0
        %vm486 = vcmp.gt.f32.partialorder %v468, 0.0
        %vm487 = vcmp.gt.f32.partialorder %v482, 0.0
        %v488 = vmul.f32 %v466, 0.2
        %v489 = vmul.f32 %v480, 0.2
        %v490 = vmul.f32 %v468, 0.2
        %v491 = vmul.f32 %v482, 0.2
        %v492 = vsel %vm484, %v466, %v488
        %v493 = vsel %vm485, %v480, %v489
        %v494 = vsel %vm486, %v468, %v490
        %v495 = vsel %vm487, %v482, %v491
        %v496 = vld [vmem:[%s5] sm:$0xf]
        %v497 = vld [vmem:[%s5 + $0x4] sm:$0xf]
        %v498 = vpack.c.bf16 %v494, %v492
        %v499 = vpack.c.bf16 %v495, %v493
        %v500 = vld [vmem:[%s6] sm:$0xff]
        %v501 = vld [vmem:[%s6 + $0x8] sm:$0xff]
        %503 = vset.pattern.permute.xlu0 0
        %504 = vperm.xlu0 %503, %v500
        %v505 = vpop.permute.xlu0 %504
        %508 = vset.pattern.permute.xlu0 0
        %509 = vperm.xlu0 %508, %v501
        %v510 = vpop.permute.xlu0 %509
        %v514 = vunpack.c.l.b16 %v496
        %v515 = vunpack.c.l.b16 %v497
        %v516 = vpack.c.b16 %v515, %v514
        %v518 = vsel %vm452, %v516, 0
        %520 = vmatpush.bf16.msra.mxu0 0
        %521 = vmatpush.bf16.msra.mxu0 0
        %522 = vmatpush.bf16.msra.mxu0 0
        %523 = vmatpush.bf16.msra.mxu0 0
        %524 = vmatpush.bf16.msra.mxu0 0
        %525 = vmatpush.bf16.msra.mxu0 0
        %526 = vmatpush.bf16.msra.mxu0 0
        %527 = vmatpush.bf16.msra.mxu0 %v498
        %528 = vmatmul.bf16.gmra.mxu0 %v518
        %v529 = vpop.f32.mrf.mxu0
        %v530 = vadd.f32 %v505, %v529
        %v531 = vpop.f32.mrf.mxu0
        %v532 = vadd.f32 %v510, %v531
        %533 = vdwg.mxu0
        %534 = vmatpush.bf16.msra.mxu0 0
        %535 = vmatpush.bf16.msra.mxu0 0
        %536 = vmatpush.bf16.msra.mxu0 0
        %537 = vmatpush.bf16.msra.mxu0 0
        %538 = vmatpush.bf16.msra.mxu0 0
        %539 = vmatpush.bf16.msra.mxu0 0
        %540 = vmatpush.bf16.msra.mxu0 0
        %541 = vmatpush.bf16.msra.mxu0 %v499
        %542 = vmatmul.bf16.gmra.mxu0 %v518
        %v543 = vpop.f32.mrf.mxu0
        %v544 = vadd.f32 %v505, %v543
        %v545 = vpop.f32.mrf.mxu0
        %v546 = vadd.f32 %v510, %v545
        %547 = vdwg.mxu0
        %vm548 = vcmp.gt.f32.partialorder %v530, 0.0
        %vm549 = vcmp.gt.f32.partialorder %v544, 0.0
        %vm550 = vcmp.gt.f32.partialorder %v532, 0.0
        %vm551 = vcmp.gt.f32.partialorder %v546, 0.0
        %v552 = vmul.f32 %v530, 0.2
        %v553 = vmul.f32 %v544, 0.2
        %v554 = vmul.f32 %v532, 0.2
        %v555 = vmul.f32 %v546, 0.2
        %v556 = vsel %vm548, %v530, %v552
        %v557 = vsel %vm549, %v544, %v553
        %v558 = vsel %vm550, %v532, %v554
        %v559 = vsel %vm551, %v546, %v555
        %v560 = vld [vmem:[%s7] sm:$0xf]
        %v561 = vpack.c.bf16 %v558, %v556
        %v562 = vpack.c.bf16 %v559, %v557
        %v563 = vld [vmem:[%s8] sm:$0xff]
        %565 = vset.pattern.permute.xlu0 0
        %566 = vperm.xlu0 %565, %v563
        %v567 = vpop.permute.xlu0 %566
        %v570 = vsel %vm452, %v560, 0
        %572 = vmatpush.bf16.msra.mxu0 0
        %573 = vmatpush.bf16.msra.mxu0 0
        %574 = vmatpush.bf16.msra.mxu0 0
        %575 = vmatpush.bf16.msra.mxu0 0
        %576 = vmatpush.bf16.msra.mxu0 0
        %577 = vmatpush.bf16.msra.mxu0 0
        %578 = vmatpush.bf16.msra.mxu0 0
        %579 = vmatpush.bf16.msra.mxu0 %v561
        %580 = vmatmul.bf16.gmra.mxu0 %v570
        %v581 = vpop.f32.mrf.mxu0
        %v582 = vadd.f32 %v567, %v581
        %v583 = vpop.f32.mrf.mxu0
        %584 = vdwg.mxu0
        %585 = vmatpush.bf16.msra.mxu0 0
        %586 = vmatpush.bf16.msra.mxu0 0
        %587 = vmatpush.bf16.msra.mxu0 0
        %588 = vmatpush.bf16.msra.mxu0 0
        %589 = vmatpush.bf16.msra.mxu0 0
        %590 = vmatpush.bf16.msra.mxu0 0
        %591 = vmatpush.bf16.msra.mxu0 0
        %592 = vmatpush.bf16.msra.mxu0 %v562
        %593 = vmatmul.bf16.gmra.mxu0 %v570
        %v594 = vpop.f32.mrf.mxu0
        %v595 = vadd.f32 %v567, %v594
        %v596 = vpop.f32.mrf.mxu0
        %597 = vdwg.mxu0
        %vm598 = vcmp.gt.f32.partialorder %v582, 0.0
        %vm599 = vcmp.gt.f32.partialorder %v595, 0.0
        %v600 = vmul.f32 %v582, 0.2
        %v601 = vmul.f32 %v595, 0.2
        %v602 = vsel %vm598, %v582, %v600
        %v603 = vsel %vm599, %v595, %v601
        %v604 = vpack.c.bf16 %v603, %v602
        %605 = vst [vmem:[%s352] sm:$0xff] %v604
        %s606 = sand.u32 %s228, 1
        %s607 = scalar_lea.sflag [#allocation4], %s606
        %s608 = sand.u32 %s228, 1
        %s609 = smul.addr %s608, 8
        %s610 = scalar_lea.vmem [#allocation5], %s609
        // Predicated region
        $region61: #{tpu_custom_call.1} parent=55 // pred_check
          %p611 = pneg %p238
        $region62: #{tpu_custom_call.1} parent=55 // pred_check_branch
          %613 = sbr.rel (%p611) target = $region64
        $region63: #{tpu_custom_call.1} parent=55 // pred_region
          %s614 = smul.u32 2, %s26
          %616 = vsyncadd %s607, 0
          %s617 = smul.addr %s614, 4
          %s618 = scalar_lea.hbm %s9, %s617
          %s620 = sshll.u32 %s610, 4
          %s621 = int_to_ptr.vmem [resolvable:$true] %s620
          %s622 = sshll.u32 %s618, 4
          %s623 = int_to_ptr.hbm [resolvable:$true] %s622
          %625 = dma.vmem_to_hbm [thread:$0]  %s621, 128, %s623, %s607
        $region64: #{tpu_custom_call.1} parent=55 // pred_fallthru
          _
      $region56: #{tpu_custom_call.1} parent=5 // pred_fallthru
        _
      %p626 = scmp.le.s32.totalorder 2, %s21
      // Predicated region
      $region65: #{tpu_custom_call.1} parent=5 // pred_check
        %p627 = pneg %p626
      $region66: #{tpu_custom_call.1} parent=5 // pred_check_branch
        %629 = sbr.rel (%p627) target = $region68
      $region67: #{tpu_custom_call.1} parent=5 // pred_region
        %s630 = ssub.s32 %s21, 2
        // Predicated region
        $region69: #{tpu_custom_call.1} parent=67 // pred_check
          %p631 = pneg %p244
        $region70: #{tpu_custom_call.1} parent=67 // pred_check_branch
          %633 = sbr.rel (%p631) target = $region72
        $region71: #{tpu_custom_call.1} parent=67 // pred_region
          %s634 = sand.u32 %s229, 1
          %s635 = scalar_lea.sflag [#allocation4], %s634
          %s636 = sand.u32 %s229, 1
          %s637 = smul.addr %s636, 8
          %s638 = scalar_lea.vmem [#allocation5], %s637
          %640 = dma.done %s635, 128
        $region72: #{tpu_custom_call.1} parent=67 // pred_fallthru
          _
      $region68: #{tpu_custom_call.1} parent=5 // pred_fallthru
        _
    $region6: #{tpu_custom_call.1} parent=1 // loop_footer
      %s25 = sadd.s32 1, %s21
    $region7: #{tpu_custom_call.1} parent=1 // loop_footer_branch
      %20 = sbr.rel target = $region3
    $region8: #{tpu_custom_call.1} parent=1 // loop_exit
      _
    %641 = vsyncpa [#allocation3], 1
    %s642 = scalar_lea.sflag [#allocation3], 1
    %643 = vsyncpa %s642, 1
    %644 = vsyncpa [#allocation4], 1
    %s645 = scalar_lea.sflag [#allocation4], 1
    %646 = vsyncpa %s645, 1

</llo_original>
